<compile_context>
chip_gen: v7x
topology: tpu7x:2x2x1
jax: 0.10.0
libtpu: 0.0.40
codegen_flags: <defaults>
</compile_context>

<pallas_src>
import functools
import math

import jax
import jax.numpy as jnp
from jax import lax
from jax.experimental import pallas as pl
from jax.experimental.pallas import tpu as pltpu


def _rms_norm_kernel(x_ref, w_ref, o_ref, *, eps: float):
    # x_ref: (B, N) f32 — full (unpadded) array resident in VMEM.
    # w_ref: (1, N) f32.
    x = x_ref[...]
    w = w_ref[...]
    # Exact mean over the N real lanes (XLU reduce; padded lanes never enter).
    mean_sq = jnp.mean(x * x, axis=-1, keepdims=True)
    inv_rms = lax.rsqrt(mean_sq + eps)  # EUP rsqrt — free slot
    o_ref[...] = (x * inv_rms) * w  # weight broadcast over batch rows


def rms_norm(x, weight, normalized_shape=(2, 2, 3)):
    """x: [2,5,2,2,3] f32, weight: [2,2,3] f32 -> [2,5,2,2,3] f32."""
    n_dims = len(normalized_shape)
    assert x.shape[-n_dims:] == tuple(normalized_shape)
    assert weight.shape == tuple(normalized_shape)

    n_norm = math.prod(normalized_shape)
    b = math.prod(x.shape[:-n_dims])

    # aten.rms_norm default when eps is None: finfo(x.dtype).eps
    eps = float(jnp.finfo(x.dtype).eps)

    # Contiguous row-major reshapes — layout no-ops, no data movement.
    x2d = x.reshape(b, n_norm)
    w2d = weight.reshape(1, n_norm)

    itemsize = jnp.dtype(x.dtype).itemsize
    cost = pl.CostEstimate(
        flops=5 * b * n_norm,                       # ~600: sq, 2 muls, add, div-ish
        transcendentals=b,                          # one rsqrt per row
        bytes_accessed=(2 * b * n_norm + n_norm) * itemsize,  # x in + out + weight
    )

    out2d = pl.pallas_call(
        functools.partial(_rms_norm_kernel, eps=eps),
        out_shape=jax.ShapeDtypeStruct((b, n_norm), x.dtype),
        in_specs=[
            pl.BlockSpec(memory_space=pltpu.MemorySpace.VMEM),
            pl.BlockSpec(memory_space=pltpu.MemorySpace.VMEM),
        ],
        out_specs=pl.BlockSpec(memory_space=pltpu.MemorySpace.VMEM),
        cost_estimate=cost,
    )(x2d, w2d)

    return out2d.reshape(x.shape)


if __name__ == "__main__":
    key = jax.random.PRNGKey(0)
    kx, kw = jax.random.split(key)

    # Shapes exactly as annotated in the PyTorch module.
    x = jax.random.normal(kx, (2, 5, 2, 2, 3), dtype=jnp.float32)
    weight = jax.random.normal(kw, (2, 2, 3), dtype=jnp.float32)

    out = rms_norm(x, weight)
    out = jax.block_until_ready(out)

    # Reference: plain-JAX aten.rms_norm decomposition (eps=None -> finfo eps).
    eps = jnp.finfo(jnp.float32).eps
    mean_sq = jnp.mean(x * x, axis=(-3, -2, -1), keepdims=True)
    ref = x * lax.rsqrt(mean_sq + eps) * weight
    assert out.shape == (2, 5, 2, 2, 3)
    assert jnp.allclose(out, ref, atol=1e-6, rtol=1e-6)

    print("KERNEL_OK")
</pallas_src>

<mosaic_0001>
module attributes {stable_mosaic.version = 11 : i64} {
  func.func @_rms_norm_kernel(%arg0: memref<10x12xf32, #tpu.memory_space<vmem>>, %arg1: memref<1x12xf32, #tpu.memory_space<vmem>>, %arg2: memref<10x12xf32, #tpu.memory_space<vmem>>) attributes {dimension_semantics = [], scalar_prefetch = 0 : i64, scratch_operands = 0 : i64, tpu.core_type = #tpu.core_type<tc>} {
    %c0 = arith.constant 0 : index
    %c0_0 = arith.constant 0 : index
    %0 = vector.load %arg0[%c0, %c0_0] : memref<10x12xf32, #tpu.memory_space<vmem>>, vector<10x12xf32>
    %c0_1 = arith.constant 0 : index
    %c0_2 = arith.constant 0 : index
    %1 = vector.load %arg1[%c0_1, %c0_2] : memref<1x12xf32, #tpu.memory_space<vmem>>, vector<1x12xf32>
    %2 = arith.mulf %0, %0 : vector<10x12xf32>
    %cst = arith.constant dense<0.000000e+00> : vector<10xf32>
    %3 = vector.multi_reduction <add>, %2, %cst [1] : vector<10x12xf32> to vector<10xf32>
    %4 = vector.shape_cast %3 : vector<10xf32> to vector<10x1xf32>
    %cst_3 = arith.constant 1.200000e+01 : f32
    %5 = vector.broadcast %cst_3 : f32 to vector<10x1xf32>
    %6 = arith.divf %4, %5 : vector<10x1xf32>
    %cst_4 = arith.constant 1.1920929E-7 : f32
    %7 = vector.broadcast %cst_4 : f32 to vector<10x1xf32>
    %8 = arith.addf %6, %7 : vector<10x1xf32>
    %9 = math.rsqrt %8 : vector<10x1xf32>
    %10 = vector.broadcast %9 : vector<10x1xf32> to vector<10x12xf32>
    %11 = arith.mulf %0, %10 : vector<10x12xf32>
    %12 = vector.broadcast %1 : vector<1x12xf32> to vector<10x12xf32>
    %13 = arith.mulf %11, %12 : vector<10x12xf32>
    %c0_5 = arith.constant 0 : index
    %c0_6 = arith.constant 0 : index
    %14 = vector.load %arg2[%c0_5, %c0_6] : memref<10x12xf32, #tpu.memory_space<vmem>>, vector<10x12xf32>
    tpu.vector_store %arg2[%c0_5, %c0_6], %13 {strides = array<i32>} : memref<10x12xf32, #tpu.memory_space<vmem>>, vector<10x12xf32>,
    return
  }
}

</mosaic_0001>

<llo_original>
// kernel: tpu_custom_call.1
$region0: #{tpu_custom_call.1}
  #allocation0 [shape = 'u32[]', space=smem, size = 0x4, offset = 0x4, fixed_abs, tag = 'smem constant byte address 0x4 - core index']
  #allocation1 [shape = 'u32[144,128]{1,0:T(1,128)}', space=vmem, size = 0x12000, scoped, tag = 'internal scratch']
  %s0 = inlined_call_operand.hbm [shape: f32[10,12], index: 0, kind: input, shape index: {}]
  %s1 = inlined_call_operand.vmem [shape: f32[1,12], index: 1, kind: input, shape index: {}]
  %s2 = inlined_call_operand.hbm [shape: f32[10,12], index: 2, kind: output, shape index: {}]
  %s3 = sld [smem:[#allocation0]]
  $region22: #{tpu_custom_call.1} parent=0
    _
  %s5 = ssub.s32 1, %s3
  %s6 = scalar_select 0, %s5, %s3
  $region1: #{tpu_custom_call.1} parent=0
    #allocation2 [shape = 'u8[8192]{0}', space=vmem, size = 0x2000, scoped, tag = 'input window, operand 0, single buffered']
    #allocation3 [shape = 's32[1]{0}', space=sflag, size = 0x4, scoped, tag = 'scoped memory for tpu_custom_call.1']
    #allocation4 [shape = 's32[1]{0}', space=sflag, size = 0x4, scoped, tag = 'scoped memory for tpu_custom_call.1']
    #allocation5 [shape = 'u8[8192]{0}', space=vmem, size = 0x2000, scoped, tag = 'output window, operand 0, single buffered']
    %7 = vsyncpa [#allocation3], 0
    %8 = vsyncpa [#allocation4], 0
    // Predicated region
    $region2: #{tpu_custom_call.1} parent=1 // pred_check
      _
    $region3: #{tpu_custom_call.1} parent=1 // pred_check_branch
      %10 = sbr.rel (0) target = $region5
    $region4: #{tpu_custom_call.1} parent=1 // pred_region
      %s12 = ssub.s32 256, 256
      %13 = vsyncadd [#allocation3], %s12
      %s14 = sshll.u32 [#allocation2], 4
      %s15 = int_to_ptr.vmem [resolvable:$true] %s14
      %20 = dma.hbm_to_vmem [thread:$0]  %s0, 256, %s15, [#allocation3], 128, 128, 8
    $region5: #{tpu_custom_call.1} parent=1 // pred_fallthru
      _
    // Predicated region
    $region6: #{tpu_custom_call.1} parent=1 // pred_check
      _
    $region7: #{tpu_custom_call.1} parent=1 // pred_check_branch
      %22 = sbr.rel (0) target = $region9
    $region8: #{tpu_custom_call.1} parent=1 // pred_region
      _
    $region9: #{tpu_custom_call.1} parent=1 // pred_fallthru
      _
    // Predicated region
    $region10: #{tpu_custom_call.1} parent=1 // pred_check
      _
    $region11: #{tpu_custom_call.1} parent=1 // pred_check_branch
      %24 = sbr.rel (0) target = $region13
    $region12: #{tpu_custom_call.1} parent=1 // pred_region
      %25 = dma.done [#allocation3], 256
    $region13: #{tpu_custom_call.1} parent=1 // pred_fallthru
      _
    %v26 = vld [vmem:[#allocation2] sm:$0xff]
    %v27 = vld [vmem:[#allocation2 + $0x8] sm:$0x3]
    %v28 = vld [vmem:[%s1] sm:$0x1]
    %v29 = vmul.f32 %v26, %v26
    %v30 = vmul.f32 %v27, %v27
    %vm31 = vcmask 97280
    %v32 = vsel %vm31, %v29, 0.0
    %33 = vadd.xlane.f32.xlu0 %v32
    %v34 = vpop.xlane.xlu0 %33
    %vm35 = vcmask 91136
    %v36 = vsel %vm35, %v30, 0.0
    %37 = vadd.xlane.f32.xlu0 %v36
    %v38 = vpop.xlane.xlu0 %37
    %v39 = vrcp.pop 12.0
    %v40 = vmul.f32 %v34, %v39
    %v41 = vmul.f32 %v38, %v39
    %v42 = vadd.f32 %v40, 1.1920929e-07
    %v43 = vadd.f32 %v41, 1.1920929e-07
    %v44 = vrsqrt.pop %v42
    %v45 = vrsqrt.pop %v43
    %v46 = vmul.f32 %v26, %v44
    %v47 = vmul.f32 %v27, %v45
    %v49 = vlaneseq
    %v50 = vshrl.u32 %v49, 7
    %v51 = vsub.s32 0, %v50
    %v52 = vrot.slane %v28, %v51
    %v54 = vmul.f32 %v46, %v52
    %v55 = vmul.f32 %v47, %v52
    %56 = vst.msk [vmem:[#allocation5] sm:$0xff] %vm31, %v54
    %57 = vst.msk [vmem:[#allocation5 + $0x8] sm:$0x3] %vm35, %v55
    // Predicated region
    $region14: #{tpu_custom_call.1} parent=1 // pred_check
      _
    $region15: #{tpu_custom_call.1} parent=1 // pred_check_branch
      %59 = sbr.rel (0) target = $region17
    $region16: #{tpu_custom_call.1} parent=1 // pred_region
      %s61 = ssub.s32 256, 256
      %62 = vsyncadd [#allocation4], %s61
      %s63 = sshll.u32 [#allocation5], 4
      %s64 = int_to_ptr.vmem [resolvable:$true] %s63
      %69 = dma.vmem_to_hbm [thread:$0]  %s64, 256, %s2, [#allocation4], 128, 128, 8
    $region17: #{tpu_custom_call.1} parent=1 // pred_fallthru
      _
    // Predicated region
    $region18: #{tpu_custom_call.1} parent=1 // pred_check
      _
    $region19: #{tpu_custom_call.1} parent=1 // pred_check_branch
      %71 = sbr.rel (0) target = $region21
    $region20: #{tpu_custom_call.1} parent=1 // pred_region
      %72 = dma.done [#allocation4], 256
    $region21: #{tpu_custom_call.1} parent=1 // pred_fallthru
      _
    %73 = vsyncpa [#allocation3], 1
    %74 = vsyncpa [#allocation4], 1

</llo_original>
